<compile_context>
chip_gen: v5e
topology: v5e:2x2
jax: 0.10.0
libtpu: 0.0.40
codegen_flags: <defaults>
</compile_context>

<pallas_src>
import math

import jax
import jax.numpy as jnp
from jax.experimental import pallas as pl
from jax.experimental.pallas import tpu as pltpu


def _drop_path_kernel(x_ref, s_ref, o_ref):
    """x_ref: (TB, TN) tile, s_ref: (TB, 1) per-sample scale, o_ref: (TB, TN)."""
    # Single VPU multiply per vreg; (TB, 1) broadcasts across lanes.
    o_ref[...] = x_ref[...] * s_ref[...]


def _pick_block(dim, unit, cap):
    """Largest block size <= cap that divides `dim` and is a multiple of `unit`.

    Falls back to the full extent (always a legal BlockSpec block dim).
    """
    cap = max(unit, min(cap, dim))
    t = (cap // unit) * unit
    while t >= unit:
        if dim % t == 0:
            return t
        t -= unit
    return dim  # full-extent fallback


def drop_path(x, drop_prob, key, training=True):
    """Exact semantics of DropPath.forward.

    - drop_prob == 0.0 or eval mode: identity.
    - training: per-sample Bernoulli keep mask (broadcast over all non-batch
      dims), surviving samples scaled by 1/keep_prob.

    NOTE: drop_prob must be a static Python float (the PyTorch module stores it
    as a plain attribute); a traced value would break the early-return check.
    """
    if drop_prob == 0.0 or not training:
        return x

    keep_prob = 1.0 - float(drop_prob)
    B = x.shape[0]
    M = int(math.prod(x.shape[1:])) if x.ndim > 1 else 1
    x2 = x.reshape(B, M)

    # TODO(synk): torch.rand's RNG stream cannot be bit-matched; jax.random is used.
    # Keep decision in f32 regardless of x.dtype (avoids bf16 quantization bias),
    # then fold 1/keep_prob so the kernel is a pure scaled copy.
    rand = jax.random.uniform(key, (B,), dtype=jnp.float32)
    scale = (jnp.floor(rand + keep_prob) * (1.0 / keep_prob)).astype(x.dtype)
    scale = scale.reshape(B, 1)

    itemsize = jnp.dtype(x.dtype).itemsize
    sub_unit = {4: 8, 2: 16, 1: 32}.get(itemsize, 8)  # sublane packing unit
    tb = _pick_block(B, sub_unit, 64)
    # Cap each tile at ~4 MiB: with input & output each double-buffered the
    # pipeline stays well under v7x's 32 MiB default scoped VMEM.
    lane_cap = max(128, (4 * 1024 * 1024) // (tb * itemsize))
    tn = _pick_block(M, 128, lane_cap)
    # TODO(synk): if M is both huge and not a multiple of 128 the full-extent
    # fallback could exceed VMEM; a masked-store variant would be needed then.

    out2 = pl.pallas_call(
        _drop_path_kernel,
        out_shape=jax.ShapeDtypeStruct((B, M), x.dtype),
        grid=(B // tb, M // tn),
        in_specs=[
            pl.BlockSpec((tb, tn), lambda i, j: (i, j)),
            pl.BlockSpec((tb, 1), lambda i, j: (i, 0)),
        ],
        out_specs=pl.BlockSpec((tb, tn), lambda i, j: (i, j)),
        compiler_params=pltpu.CompilerParams(
            dimension_semantics=("parallel", "parallel")),
    )(x2, scale)
    return out2.reshape(x.shape)


if __name__ == "__main__":
    key = jax.random.PRNGKey(0)
    kx, km = jax.random.split(key)
    drop_prob = 0.3
    keep_prob = 1.0 - drop_prob

    # NCHW-style input (the module is layout agnostic; wrapper flattens non-batch dims).
    B = 2
    x = jax.random.normal(kx, (B, 4, 16, 16), dtype=jnp.float32)
    out = jax.block_until_ready(drop_path(x, drop_prob, km, training=True))

    rand = jax.random.uniform(km, (B,), dtype=jnp.float32)
    mask = jnp.floor(rand + keep_prob).reshape((B,) + (1,) * (x.ndim - 1))
    ref = x / keep_prob * mask
    assert jnp.allclose(out, ref, atol=1e-5), "f32 kernel mismatch vs reference"

    # bf16 input with a feature extent that is not a multiple of 128 (exercises
    # full-extent fallback + f32 keep-decision path).
    x2 = jax.random.normal(kx, (2, 8, 48), dtype=jnp.bfloat16)
    out2 = jax.block_until_ready(drop_path(x2, drop_prob, km, training=True))
    scale2 = (jnp.floor(rand + keep_prob) / keep_prob).astype(jnp.bfloat16).reshape(2, 1, 1)
    ref2 = x2 * scale2
    assert jnp.allclose(out2.astype(jnp.float32), ref2.astype(jnp.float32),
                        atol=1e-2), "bf16 kernel mismatch vs reference"

    # Larger, tile-aligned shape (exercises the multi-block grid path).
    x3 = jax.random.normal(kx, (16, 8, 16, 32), dtype=jnp.float32)
    out3 = jax.block_until_ready(drop_path(x3, drop_prob, km, training=True))
    rand3 = jax.random.uniform(km, (16,), dtype=jnp.float32)
    mask3 = jnp.floor(rand3 + keep_prob).reshape((16, 1, 1, 1))
    ref3 = x3 / keep_prob * mask3
    assert jnp.allclose(out3, ref3, atol=1e-5), "tiled kernel mismatch vs reference"

    # eval / drop_prob == 0 paths are identity.
    assert jnp.array_equal(drop_path(x, drop_prob, km, training=False), x)
    assert jnp.array_equal(drop_path(x, 0.0, km, training=True), x)

    print("KERNEL_OK")
</pallas_src>

<mosaic_0001>
module attributes {stable_mosaic.version = 11 : i64} {
  func.func @_drop_path_kernel(%arg0: i32, %arg1: i32, %arg2: memref<2x1024xf32, #tpu.memory_space<vmem>>, %arg3: memref<2x1xf32, #tpu.memory_space<vmem>>, %arg4: memref<2x1024xf32, #tpu.memory_space<vmem>>) attributes {dimension_semantics = [#tpu.dimension_semantics<parallel>, #tpu.dimension_semantics<parallel>], iteration_bounds = array<i64: 1, 1>, scalar_prefetch = 0 : i64, scratch_operands = 0 : i64, tpu.core_type = #tpu.core_type<tc>, window_params = [{transform_indices = @transform_0, window_bounds = array<i64: 2, 1024>}, {transform_indices = @transform_1, window_bounds = array<i64: 2, 1>}, {transform_indices = @transform_2, window_bounds = array<i64: 2, 1024>}]} {
    %c0 = arith.constant 0 : index
    %c0_0 = arith.constant 0 : index
    %0 = vector.load %arg2[%c0, %c0_0] : memref<2x1024xf32, #tpu.memory_space<vmem>>, vector<2x1024xf32>
    %c0_1 = arith.constant 0 : index
    %c0_2 = arith.constant 0 : index
    %1 = vector.load %arg3[%c0_1, %c0_2] : memref<2x1xf32, #tpu.memory_space<vmem>>, vector<2x1xf32>
    %2 = vector.broadcast %1 : vector<2x1xf32> to vector<2x1024xf32>
    %3 = arith.mulf %0, %2 : vector<2x1024xf32>
    %c0_3 = arith.constant 0 : index
    %c0_4 = arith.constant 0 : index
    %4 = vector.load %arg4[%c0_3, %c0_4] : memref<2x1024xf32, #tpu.memory_space<vmem>>, vector<2x1024xf32>
    tpu.vector_store %arg4[%c0_3, %c0_4], %3 {strides = array<i32>} : memref<2x1024xf32, #tpu.memory_space<vmem>>, vector<2x1024xf32>,
    return
  }
  func.func @transform_0(%arg0: i32, %arg1: i32) -> (i32, i32) {
    %c0_i32 = arith.constant 0 : i32
    return %arg0, %arg1 : i32, i32
  }
  func.func @transform_1(%arg0: i32, %arg1: i32) -> (i32, i32) {
    %c0_i32 = arith.constant 0 : i32
    %c0_i32_0 = arith.constant 0 : i32
    return %arg0, %c0_i32 : i32, i32
  }
  func.func @transform_2(%arg0: i32, %arg1: i32) -> (i32, i32) {
    %c0_i32 = arith.constant 0 : i32
    return %arg0, %arg1 : i32, i32
  }
}

</mosaic_0001>

<llo_original>
// kernel: tpu_custom_call.1
$region0: #{tpu_custom_call.1}
  #allocation0 [shape = 'u32[]', space=smem, size = 0x4, offset = 0x4, fixed_abs, tag = 'smem constant byte address 0x4 - core index']
  #allocation1 [shape = 'u32[72,128]{1,0:T(1,128)}', space=vmem, size = 0x9000, scoped, tag = 'internal scratch']
  %s0 = inlined_call_operand.hbm [shape: f32[2,1024], index: 0, kind: input, shape index: {}]
  %s1 = inlined_call_operand.vmem [shape: f32[2,1], index: 1, kind: input, shape index: {}]
  %s2 = inlined_call_operand.hbm [shape: f32[2,1024], index: 2, kind: output, shape index: {}]
  %s3 = sld [smem:[#allocation0]]
  $region22: #{tpu_custom_call.1} parent=0
    _
  %s5 = ssub.s32 1, %s3
  %s6 = scalar_select 0, %s5, %s3
  $region1: #{tpu_custom_call.1} parent=0
    #allocation2 [shape = 'u8[8192]{0}', space=vmem, size = 0x2000, scoped, tag = 'input window, operand 0, single buffered']
    #allocation3 [shape = 's32[1]{0}', space=sflag, size = 0x4, scoped, tag = 'scoped memory for tpu_custom_call.1']
    #allocation4 [shape = 's32[1]{0}', space=sflag, size = 0x4, scoped, tag = 'scoped memory for tpu_custom_call.1']
    #allocation5 [shape = 'u8[8192]{0}', space=vmem, size = 0x2000, scoped, tag = 'output window, operand 0, single buffered']
    %7 = vsyncpa [#allocation3], 0
    %8 = vsyncpa [#allocation4], 0
    // Predicated region
    $region2: #{tpu_custom_call.1} parent=1 // pred_check
      _
    $region3: #{tpu_custom_call.1} parent=1 // pred_check_branch
      %10 = sbr.rel (0) target = $region5
    $region4: #{tpu_custom_call.1} parent=1 // pred_region
      %12 = vsyncadd [#allocation3], 0
      %s14 = sshll.u32 %s0, 4
      %s15 = int_to_ptr.hbm [resolvable:$true] %s14
      %s16 = sshll.u32 [#allocation2], 4
      %s17 = int_to_ptr.vmem [resolvable:$true] %s16
      %19 = dma.hbm_to_vmem [thread:$0]  %s15, 256, %s17, [#allocation3]
    $region5: #{tpu_custom_call.1} parent=1 // pred_fallthru
      _
    // Predicated region
    $region6: #{tpu_custom_call.1} parent=1 // pred_check
      _
    $region7: #{tpu_custom_call.1} parent=1 // pred_check_branch
      %21 = sbr.rel (0) target = $region9
    $region8: #{tpu_custom_call.1} parent=1 // pred_region
      _
    $region9: #{tpu_custom_call.1} parent=1 // pred_fallthru
      _
    // Predicated region
    $region10: #{tpu_custom_call.1} parent=1 // pred_check
      _
    $region11: #{tpu_custom_call.1} parent=1 // pred_check_branch
      %23 = sbr.rel (0) target = $region13
    $region12: #{tpu_custom_call.1} parent=1 // pred_region
      %25 = dma.done [#allocation3], 256
    $region13: #{tpu_custom_call.1} parent=1 // pred_fallthru
      _
    %v26 = vld [vmem:[#allocation2] sm:$0xff]
    %v27 = vld [vmem:[#allocation2 + $0x8] sm:$0xff]
    %v28 = vld [vmem:[%s1] sm:$0x3]
    %30 = vset.pattern.permute.xlu0 0
    %31 = vperm.xlu0 %30, %v28
    %v32 = vpop.permute.xlu0 %31
    %v34 = vunpack.c.l.s4 269488144
    %v35 = vunpack.c.0.s8 %v34
    %v36 = vperm.slane %v32, %v35
    %v38 = vmul.f32 %v26, %v36
    %v39 = vmul.f32 %v27, %v36
    %40 = vst [vmem:[#allocation5] sm:$0xff] %v38
    %41 = vst [vmem:[#allocation5 + $0x8] sm:$0xff] %v39
    // Predicated region
    $region14: #{tpu_custom_call.1} parent=1 // pred_check
      _
    $region15: #{tpu_custom_call.1} parent=1 // pred_check_branch
      %43 = sbr.rel (0) target = $region17
    $region16: #{tpu_custom_call.1} parent=1 // pred_region
      %45 = vsyncadd [#allocation4], 0
      %s47 = sshll.u32 [#allocation5], 4
      %s48 = int_to_ptr.vmem [resolvable:$true] %s47
      %s49 = sshll.u32 %s2, 4
      %s50 = int_to_ptr.hbm [resolvable:$true] %s49
      %52 = dma.vmem_to_hbm [thread:$0]  %s48, 256, %s50, [#allocation4]
    $region17: #{tpu_custom_call.1} parent=1 // pred_fallthru
      _
    // Predicated region
    $region18: #{tpu_custom_call.1} parent=1 // pred_check
      _
    $region19: #{tpu_custom_call.1} parent=1 // pred_check_branch
      %54 = sbr.rel (0) target = $region21
    $region20: #{tpu_custom_call.1} parent=1 // pred_region
      %56 = dma.done [#allocation4], 256
    $region21: #{tpu_custom_call.1} parent=1 // pred_fallthru
      _
    %57 = vsyncpa [#allocation3], 1
    %58 = vsyncpa [#allocation4], 1

</llo_original>
